<compile_context>
chip_gen: v6e
topology: v6e:2x2x1
jax: 0.10.0
libtpu: 0.0.40
codegen_flags: <defaults>
</compile_context>

<pallas_src>
import functools

import jax
import jax.numpy as jnp
from jax.experimental import pallas as pl
from jax.experimental.pallas import tpu as pltpu

HIGHEST = jax.lax.Precision.HIGHEST


# ---------------------------------------------------------------------------
# GroupNorm statistics (tiled Pallas pass) + tiny [N, C] glue
# ---------------------------------------------------------------------------
def _gn_stats_kernel(x_ref, o_ref):
    """Accumulate per-(folded-)channel sum / sum-of-squares across spatial tiles."""
    s = pl.program_id(1)

    @pl.when(s == 0)
    def _():
        o_ref[...] = jnp.zeros_like(o_ref)

    x = x_ref[0].astype(jnp.float32)                    # [ts, Cf]
    s1 = jnp.sum(x, axis=0, keepdims=True)              # [1, Cf]
    s2 = jnp.sum(x * x, axis=0, keepdims=True)          # [1, Cf]
    o_ref[0] += jnp.concatenate([s1, s2], axis=0)       # [2, Cf]


def _spatial_tile(S, max_rows=8192):
    ts = max_rows
    while ts >= 8:
        if S % ts == 0:
            return ts
        ts //= 2
    return S                                            # fallback: one full block


def _lane_fold(S, C):
    """Fold factor k so that k*C fills the 128-lane vreg (lane-dense tiles)."""
    k = 1
    if C < 128:
        k = 128 // C
        while k > 1 and S % k != 0:
            k //= 2
    return max(k, 1)


def gn_scale_shift(x3, gamma, beta, num_groups=32, eps=1e-6):
    """GroupNorm(num_groups, eps) over [N, S, C] -> per-sample scale/shift [N,1,C].

    The normalize + affine + SiLU is applied later, fused inside the conv kernel.
    """
    N, S, C = x3.shape
    G = num_groups
    Cg = C // G

    k = _lane_fold(S, C)
    Cf = k * C
    Sf = S // k
    xf = x3.reshape(N, Sf, Cf)                          # lane-dense view
    ts = _spatial_tile(Sf)
    n_s = Sf // ts

    stats = pl.pallas_call(
        _gn_stats_kernel,
        out_shape=jax.ShapeDtypeStruct((N, 2, Cf), jnp.float32),
        grid=(N, n_s),
        in_specs=[pl.BlockSpec((1, ts, Cf), lambda n, s: (n, s, 0))],
        out_specs=pl.BlockSpec((1, 2, Cf), lambda n, s: (n, 0, 0)),
        compiler_params=pltpu.CompilerParams(
            dimension_semantics=("parallel", "arbitrary")),
    )(xf)

    # fold the k lane-replicas back to true channels, then channels -> groups
    stats = stats.reshape(N, 2, k, C).sum(axis=2)        # [N, 2, C]
    cnt = float(S * Cg)
    s1g = stats[:, 0, :].reshape(N, G, Cg).sum(-1)
    s2g = stats[:, 1, :].reshape(N, G, Cg).sum(-1)
    mean_g = s1g / cnt
    var_g = jnp.maximum(s2g / cnt - mean_g * mean_g, 0.0)   # clamp -> no NaN rsqrt
    inv_g = jax.lax.rsqrt(var_g + eps)
    mean_c = jnp.repeat(mean_g, Cg, axis=-1)                 # [N, C]
    inv_c = jnp.repeat(inv_g, Cg, axis=-1)
    scale = (gamma[None, :] * inv_c).reshape(N, 1, C).astype(jnp.float32)
    shift = (beta[None, :] - mean_c * gamma[None, :] * inv_c
             ).reshape(N, 1, C).astype(jnp.float32)
    return scale, shift


# ---------------------------------------------------------------------------
# Fused (GN affine + SiLU) -> 3x3x3 "same" conv (+ bias, + residual/shortcut)
# ---------------------------------------------------------------------------
def _conv_gn_silu_kernel(x_ref, scale_ref, shift_ref, w_ref, b_ref, *rest,
                         shortcut):
    """One grid step (= one sample n).

    x_ref:     (1, D, H, W, Cin)   raw (pre-norm) activation, f32 or bf16
    scale_ref: (1, 1, Cin) f32     GN scale  (gamma * inv_std)
    shift_ref: (1, 1, Cin) f32     GN shift  (beta - mean * gamma * inv_std)
    w_ref:     (3, 9*Cin, Cout) bf16  conv weights, resident in VMEM
    b_ref:     (1, Cout) f32       conv bias
    rest:      shortcut == "none":      (o_ref, acc_ref)
               shortcut == "identity":  (xin_ref, o_ref, acc_ref)
               shortcut == "conv":      (xin_ref, wsc_ref, bsc_ref, o_ref, acc_ref)
    o_ref:     (1, D, H*W, Cout)   output block (bf16 or f32)
    acc_ref:   (D, H*W, Cout) f32  VMEM accumulator scratch
    """
    if shortcut == "none":
        o_ref, acc_ref = rest
        xin_ref = wsc_ref = bsc_ref = None
    elif shortcut == "identity":
        xin_ref, o_ref, acc_ref = rest
        wsc_ref = bsc_ref = None
    else:
        xin_ref, wsc_ref, bsc_ref, o_ref, acc_ref = rest

    _, D, H, W, Cin = x_ref.shape
    Cout = w_ref.shape[-1]
    HW = H * W

    # ---- init accumulator: bias (+ fused identity residual / 1x1x1 shortcut)
    bias = jnp.broadcast_to(b_ref[...], (HW, Cout))          # f32, hoisted
    for d in range(D):
        if shortcut == "none":
            acc_ref[d] = bias
        elif shortcut == "identity":
            acc_ref[d] = bias + xin_ref[0, d].astype(jnp.float32)
        else:  # conv shortcut
            sc = jnp.dot(xin_ref[0, d].astype(jnp.bfloat16), wsc_ref[...],
                         preferred_element_type=jnp.float32)
            acc_ref[d] = bias + sc + bsc_ref[...]

    # ---- main loop: one pass over input depth planes, each plane feeds up to
    #      3 output depths (kd taps), so the activation is touched exactly once
    scale = scale_ref[0]                                      # [1, Cin] f32
    shift = shift_ref[0]
    zrow = jnp.zeros((1, W, Cin), jnp.bfloat16)
    zcol = jnp.zeros((H + 2, 1, Cin), jnp.bfloat16)
    for din in range(D):
        xp = x_ref[0, din].astype(jnp.float32)                # [H, W, Cin]
        y = xp * scale + shift                                # GN affine (VPU, f32)
        y = (y * jax.nn.sigmoid(y)).astype(jnp.bfloat16)      # SiLU (EUP) -> bf16
        # in-VMEM zero halo (padding AFTER SiLU, so pad values are exactly 0)
        yp = jnp.concatenate([zrow, y, zrow], axis=0)         # [H+2, W,   Cin]
        yp = jnp.concatenate([zcol, yp, zcol], axis=1)        # [H+2, W+2, Cin]
        # gather the 9 (kh, kw) taps in bf16 -> [HW, 9*Cin]
        a = jnp.concatenate(
            [yp[kh:kh + H, kw:kw + W, :].reshape(HW, Cin)
             for kh in range(3) for kw in range(3)], axis=-1)
        for kd in range(3):
            dout = din + 1 - kd                               # out[dout] uses in[dout+kd-1]
            if 0 <= dout < D:
                acc_ref[dout] += jnp.dot(a, w_ref[kd],
                                         preferred_element_type=jnp.float32)

    o_ref[0] = acc_ref[...].astype(o_ref.dtype)


def conv3x3x3_gn_silu(x5, scale, shift, w, b, *, out_dtype,
                      xin=None, wsc=None, bsc=None):
    """Fused (GN affine + SiLU) -> 3x3x3 'same' conv in NDHWC.

    x5:    [N, D, H, W, Cin]  raw (pre-norm) activation (f32 or bf16)
    scale: [N, 1, Cin] f32    shift: [N, 1, Cin] f32  (GroupNorm fold)
    w:     [3, 3, 3, Cin, Cout]   b: [Cout]
    xin:   optional [N, D, H*W, Cres] residual input; added as-is if wsc is
           None (identity), otherwise xin @ wsc + bsc (1x1x1 nin_shortcut).
    returns [N, D, H*W, Cout] with dtype out_dtype.
    """
    N, D, H, W, Cin = x5.shape
    Cout = w.shape[-1]
    HW = H * W

    w_mat = w.reshape(3, 9 * Cin, Cout).astype(jnp.bfloat16)
    b_row = b.reshape(1, Cout).astype(jnp.float32)

    if xin is None:
        shortcut = "none"
    elif wsc is None:
        shortcut = "identity"
    else:
        shortcut = "conv"

    in_specs = [
        pl.BlockSpec((1, D, H, W, Cin), lambda n: (n, 0, 0, 0, 0)),
        pl.BlockSpec((1, 1, Cin), lambda n: (n, 0, 0)),
        pl.BlockSpec((1, 1, Cin), lambda n: (n, 0, 0)),
        # constant index_map -> weights DMA'd once, resident across the grid
        pl.BlockSpec((3, 9 * Cin, Cout), lambda n: (0, 0, 0)),
        pl.BlockSpec((1, Cout), lambda n: (0, 0)),
    ]
    args = [x5, scale, shift, w_mat, b_row]
    if shortcut != "none":
        Cres = xin.shape[-1]
        in_specs.append(pl.BlockSpec((1, D, HW, Cres), lambda n: (n, 0, 0, 0)))
        args.append(xin)
    if shortcut == "conv":
        in_specs.append(pl.BlockSpec(wsc.shape, lambda n: (0, 0)))
        in_specs.append(pl.BlockSpec((1, Cout), lambda n: (0, 0)))
        args.append(wsc.astype(jnp.bfloat16))
        args.append(bsc.reshape(1, Cout).astype(jnp.float32))

    kern = functools.partial(_conv_gn_silu_kernel, shortcut=shortcut)
    return pl.pallas_call(
        kern,
        out_shape=jax.ShapeDtypeStruct((N, D, HW, Cout), out_dtype),
        grid=(N,),
        in_specs=in_specs,
        out_specs=pl.BlockSpec((1, D, HW, Cout), lambda n: (n, 0, 0, 0)),
        scratch_shapes=[pltpu.VMEM((D, HW, Cout), jnp.float32)],
        compiler_params=pltpu.CompilerParams(
            dimension_semantics=("parallel",)),
    )(*args)


# ---------------------------------------------------------------------------
# ResBlock forward
# ---------------------------------------------------------------------------
def resblock_forward(x, params, num_groups=32):
    """x: [N, D, H, W, Cin] (NDHWC) -> [N, D, H, W, Cout]."""
    N, D, H, W, Cin = x.shape
    S = D * H * W
    Cout = params["w1"].shape[-1]

    # GN1 stats on the f32 input; normalize + SiLU fused into conv1
    scale1, shift1 = gn_scale_shift(x.reshape(N, S, Cin),
                                    params["g1"], params["be1"], num_groups)
    h1 = conv3x3x3_gn_silu(x.astype(jnp.bfloat16), scale1, shift1,
                           params["w1"], params["b1"],
                           out_dtype=jnp.bfloat16)            # [N, D, HW, Cout] bf16

    # GN2 stats on the bf16 intermediate; normalize + SiLU fused into conv2
    # TODO(synk): GN2 stats could be accumulated in conv1's epilogue to save
    # one more full read of h1.
    scale2, shift2 = gn_scale_shift(h1.reshape(N, S, Cout),
                                    params["g2"], params["be2"], num_groups)

    xin = x.reshape(N, D, H * W, Cin)                          # residual input (f32)
    h1_5 = h1.reshape(N, D, H, W, Cout)
    if Cin != Cout:
        out = conv3x3x3_gn_silu(h1_5, scale2, shift2, params["w2"], params["b2"],
                                out_dtype=jnp.float32, xin=xin,
                                wsc=params["wsc"], bsc=params["bsc"])
    else:
        out = conv3x3x3_gn_silu(h1_5, scale2, shift2, params["w2"], params["b2"],
                                out_dtype=jnp.float32, xin=xin)
    return out.reshape(N, D, H, W, Cout)


# ---------------------------------------------------------------------------
# Pure-JAX f32 reference (correctness check)
# ---------------------------------------------------------------------------
def ref_forward(x, params, num_groups=32):
    def gn(x5, gamma, beta, eps=1e-6):
        N, D, H, W, C = x5.shape
        G = num_groups
        xr = x5.reshape(N, D * H * W, G, C // G)
        mean = xr.mean(axis=(1, 3), keepdims=True)
        var = ((xr - mean) ** 2).mean(axis=(1, 3), keepdims=True)
        y = ((xr - mean) / jnp.sqrt(var + eps)).reshape(N, D, H, W, C)
        return y * gamma + beta

    def conv3(x5, w, b):
        out = jax.lax.conv_general_dilated(
            x5, w, window_strides=(1, 1, 1), padding="SAME",
            dimension_numbers=("NDHWC", "DHWIO", "NDHWC"), precision=HIGHEST)
        return out + b

    h = gn(x, params["g1"], params["be1"])
    h = h * jax.nn.sigmoid(h)
    h = conv3(h, params["w1"], params["b1"])
    h = gn(h, params["g2"], params["be2"])
    h = h * jax.nn.sigmoid(h)
    h = conv3(h, params["w2"], params["b2"])
    if "wsc" in params:
        sc = jnp.einsum("ndhwc,co->ndhwo", x, params["wsc"],
                        precision=HIGHEST) + params["bsc"]
    else:
        sc = x
    return sc + h


# ---------------------------------------------------------------------------
if __name__ == "__main__":
    key = jax.random.PRNGKey(0)

    def make_params(k, Cin, Cout):
        ks = jax.random.split(k, 10)
        p = {
            "g1": 1.0 + 0.1 * jax.random.normal(ks[0], (Cin,), jnp.float32),
            "be1": 0.1 * jax.random.normal(ks[1], (Cin,), jnp.float32),
            "g2": 1.0 + 0.1 * jax.random.normal(ks[2], (Cout,), jnp.float32),
            "be2": 0.1 * jax.random.normal(ks[3], (Cout,), jnp.float32),
            "w1": jax.random.normal(ks[4], (3, 3, 3, Cin, Cout), jnp.float32)
                  / jnp.sqrt(27.0 * Cin),
            "b1": 0.01 * jax.random.normal(ks[5], (Cout,), jnp.float32),
            "w2": jax.random.normal(ks[6], (3, 3, 3, Cout, Cout), jnp.float32)
                  / jnp.sqrt(27.0 * Cout),
            "b2": 0.01 * jax.random.normal(ks[7], (Cout,), jnp.float32),
        }
        if Cin != Cout:
            p["wsc"] = (jax.random.normal(ks[8], (Cin, Cout), jnp.float32)
                        / jnp.sqrt(float(Cin)))
            p["bsc"] = 0.01 * jax.random.normal(ks[9], (Cout,), jnp.float32)
        return p

    def check(out, ref, tag):
        err = float(jnp.max(jnp.abs(out - ref)))
        rel = float(jnp.linalg.norm(out - ref) / jnp.linalg.norm(ref))
        # bf16 activation stream + bf16 MXU matmuls checked against an f32
        # HIGHEST-precision reference -> loose absolute tolerance.
        assert err < 1.5e-1, f"{tag}: max abs error too large: {err}"
        assert rel < 5e-2, f"{tag}: relative error too large: {rel}"

    N, D, H, W = 2, 8, 8, 8
    k1, k2, kx1, kx2 = jax.random.split(key, 4)

    # case 1: Cin != Cout -> exercises the fused 1x1x1 nin_shortcut path
    Cin, Cout = 32, 64
    params = make_params(k1, Cin, Cout)
    x = jax.random.normal(kx1, (N, D, H, W, Cin), jnp.float32)  # NCDHW [2,32,8,8,8] transposed
    out = jax.block_until_ready(resblock_forward(x, params))
    ref = jax.block_until_ready(ref_forward(x, params))
    assert out.shape == (N, D, H, W, Cout)
    check(out, ref, "case1")

    # case 2: Cin == Cout -> identity residual path
    Cin2 = Cout2 = 32
    params2 = make_params(k2, Cin2, Cout2)
    x2 = jax.random.normal(kx2, (N, D, H, W, Cin2), jnp.float32)
    out2 = jax.block_until_ready(resblock_forward(x2, params2))
    ref2 = jax.block_until_ready(ref_forward(x2, params2))
    assert out2.shape == (N, D, H, W, Cout2)
    check(out2, ref2, "case2")

    print("KERNEL_OK")
</pallas_src>

<mosaic_0001>
module attributes {stable_mosaic.version = 11 : i64} {
  func.func @_gn_stats_kernel(%arg0: i32, %arg1: i32, %arg2: memref<1x128x128xf32, #tpu.memory_space<vmem>>, %arg3: memref<1x2x128xf32, #tpu.memory_space<vmem>>) attributes {dimension_semantics = [#tpu.dimension_semantics<parallel>, #tpu.dimension_semantics<arbitrary>], iteration_bounds = array<i64: 2, 1>, scalar_prefetch = 0 : i64, scratch_operands = 0 : i64, tpu.core_type = #tpu.core_type<tc>, window_params = [{transform_indices = @transform_0, window_bounds = array<i64: 1, 128, 128>}, {transform_indices = @transform_1, window_bounds = array<i64: 1, 2, 128>}]} {
    %c0_i32 = arith.constant 0 : i32
    %0 = arith.cmpi eq, %arg1, %c0_i32 : i32
    %1 = arith.extui %0 : i1 to i32
    %c0_i32_0 = arith.constant 0 : i32
    %2 = arith.cmpi ne, %1, %c0_i32_0 : i32
    scf.if %2 {
      %cst_10 = arith.constant 0.000000e+00 : f32
      %17 = vector.broadcast %cst_10 : f32 to vector<1x2x128xf32>
      %c0_11 = arith.constant 0 : index
      %c0_12 = arith.constant 0 : index
      %c0_13 = arith.constant 0 : index
      %18 = vector.load %arg3[%c0_11, %c0_12, %c0_13] : memref<1x2x128xf32, #tpu.memory_space<vmem>>, vector<1x2x128xf32>
      tpu.vector_store %arg3[%c0_11, %c0_12, %c0_13], %17 {strides = array<i32>} : memref<1x2x128xf32, #tpu.memory_space<vmem>>, vector<1x2x128xf32>,
    } else {
    }
    %c0 = arith.constant 0 : index
    %c0_1 = arith.constant 0 : index
    %c0_2 = arith.constant 0 : index
    %3 = vector.load %arg2[%c0, %c0_1, %c0_2] : memref<1x128x128xf32, #tpu.memory_space<vmem>>, vector<1x128x128xf32>
    %4 = vector.shape_cast %3 : vector<1x128x128xf32> to vector<128x128xf32>
    %cst = arith.constant dense<0.000000e+00> : vector<128xf32>
    %5 = vector.multi_reduction <add>, %4, %cst [0] : vector<128x128xf32> to vector<128xf32>
    %6 = vector.shape_cast %5 : vector<128xf32> to vector<1x128xf32>
    %7 = arith.mulf %4, %4 : vector<128x128xf32>
    %cst_3 = arith.constant dense<0.000000e+00> : vector<128xf32>
    %8 = vector.multi_reduction <add>, %7, %cst_3 [0] : vector<128x128xf32> to vector<128xf32>
    %9 = vector.shape_cast %8 : vector<128xf32> to vector<1x128xf32>
    %c0_4 = arith.constant 0 : index
    %c0_5 = arith.constant 0 : index
    %c0_6 = arith.constant 0 : index
    %10 = vector.load %arg3[%c0_4, %c0_5, %c0_6] : memref<1x2x128xf32, #tpu.memory_space<vmem>>, vector<1x2x128xf32>
    %11 = vector.shape_cast %10 : vector<1x2x128xf32> to vector<2x128xf32>
    %12 = tpu.concatenate %6, %9 in 0 : vector<1x128xf32>, vector<1x128xf32> -> vector<2x128xf32>
    %13 = arith.addf %11, %12 : vector<2x128xf32>
    %c0_7 = arith.constant 0 : index
    %c0_8 = arith.constant 0 : index
    %c0_9 = arith.constant 0 : index
    %14 = vector.load %arg3[%c0_7, %c0_8, %c0_9] : memref<1x2x128xf32, #tpu.memory_space<vmem>>, vector<1x2x128xf32>
    %15 = vector.shape_cast %14 : vector<1x2x128xf32> to vector<2x128xf32>
    %16 = vector.shape_cast %13 : vector<2x128xf32> to vector<1x2x128xf32>
    tpu.vector_store %arg3[%c0_7, %c0_8, %c0_9], %16 {strides = array<i32>} : memref<1x2x128xf32, #tpu.memory_space<vmem>>, vector<1x2x128xf32>,
    return
  }
  func.func @transform_0(%arg0: i32, %arg1: i32) -> (i32, i32, i32) {
    %c0_i32 = arith.constant 0 : i32
    %c0_i32_0 = arith.constant 0 : i32
    return %arg0, %arg1, %c0_i32 : i32, i32, i32
  }
  func.func @transform_1(%arg0: i32, %arg1: i32) -> (i32, i32, i32) {
    %c0_i32 = arith.constant 0 : i32
    %c0_i32_0 = arith.constant 0 : i32
    %c0_i32_1 = arith.constant 0 : i32
    return %arg0, %c0_i32, %c0_i32_0 : i32, i32, i32
  }
}

</mosaic_0001>

<llo_original>
// kernel: tpu_custom_call.1
$region0: #{tpu_custom_call.1}
  #allocation0 [shape = 'u32[]', space=smem, size = 0x4, offset = 0x4, fixed_abs, tag = 'smem constant byte address 0x4 - core index']
  #allocation1 [shape = 'u32[144,128]{1,0:T(1,128)}', space=vmem, size = 0x12000, scoped, tag = 'internal scratch']
  %s0 = inlined_call_operand.hbm [shape: f32[2,128,128], index: 0, kind: input, shape index: {}]
  %s1 = inlined_call_operand.hbm [shape: f32[2,2,128], index: 1, kind: output, shape index: {}]
  %s2 = sld [smem:[#allocation0]]
  $region45: #{tpu_custom_call.1} parent=0
    _
  %s4 = ssub.s32 1, %s2
  %s5 = scalar_select 0, %s4, %s2
  $region1: #{tpu_custom_call.1} parent=0
    #allocation2 [shape = 'u8[131072]{0}', space=vmem, size = 0x20000, scoped, tag = 'input window, operand 0']
    #allocation3 [shape = 's32[2]{0}', space=sflag, size = 0x8, scoped, tag = 'scoped memory for tpu_custom_call.1']
    #allocation4 [shape = 's32[2]{0}', space=sflag, size = 0x8, scoped, tag = 'scoped memory for tpu_custom_call.1']
    #allocation5 [shape = 'u8[2048]{0}', space=vmem, size = 0x800, scoped, tag = 'output window, operand 0']
    %6 = vsyncpa [#allocation3], 0
    %s7 = scalar_lea.sflag [#allocation3], 1
    %8 = vsyncpa %s7, 0
    %9 = vsyncpa [#allocation4], 0
    %s10 = scalar_lea.sflag [#allocation4], 1
    %11 = vsyncpa %s10, 0
    loop: start=0, step=1, limit=4
    $region2: #{tpu_custom_call.1} parent=1 // loop_pre_header
      _
    $region3: #{tpu_custom_call.1} parent=1 // loop_header
      %s13 = sphi 0, %s17
      %p14 = scmp.ge.s32.totalorder %s13, 4
      %s20 = sphi 0, %s32
      %s21 = sphi 0, %s28
      %s22 = sphi 0, %s20
      %s23 = sphi 0, %s21
      %s24 = sphi 0, %s22
      %s25 = sphi 0, %s23
      %s37 = sphi 0, %s39
      %s40 = sphi 0, %s37
      %s41 = sphi 0, %s40
      %s57 = sphi 0, %s41
      %s63 = sphi 0, %s65
      %s66 = sphi 0, %s63
      %s67 = sphi 0, %s66
      %s83 = sphi 0, %s67
    $region4: #{tpu_custom_call.1} parent=1 // loop_header_branch
      %16 = sbr.rel (%p14) target = $region8
    $region5: #{tpu_custom_call.1} parent=1 // loop_body
      %s18 = ssub.s32 %s13, 1
      %s19 = ssub.s32 %s13, 2
      %s26 = sadd.s32 1, %s21
      %p27 = scmp.ge.s32.totalorder %s26, 1
      %s28 = scalar_select %p27, 0, %s26
      %s29 = sadd.s32 1, %s20
      %s30 = scalar_select %p27, %s29, %s20
      %p31 = scmp.ge.s32.totalorder %s30, 2
      %s32 = scalar_select %p31, 0, %s30
      %s33 = ssub.s32 %s20, %s32
      %s34 = ssub.s32 %s21, %s28
      %s35 = sor.u32 %s33, %s34
      %p36 = scmp.eq.s32.totalorder %s35, 0
      %s38 = sadd.s32 %s37, 1
      %s39 = scalar_select %p36, %s37, %s38
      %p42 = pneg %p36
      %p43 = scmp.eq.s32.totalorder %s13, 1
      %p44 = por %p42, %p43
      %p45 = scmp.ne.s32.totalorder %s37, %s40
      %p46 = scmp.eq.s32.totalorder %s13, 0
      %p47 = por %p45, %p46
      %p48 = scmp.ne.s32.totalorder %s37, %s40
      %p49 = scmp.eq.s32.totalorder %s18, 1
      %p50 = por %p48, %p49
      %p51 = scmp.ne.s32.totalorder %s40, %s41
      %p52 = scmp.eq.s32.totalorder %s18, 0
      %p53 = por %p51, %p52
      %p54 = scmp.ne.s32.totalorder %s40, %s41
      %p55 = scmp.eq.s32.totalorder %s19, 1
      %p56 = por %p54, %p55
      %p58 = scmp.ne.s32.totalorder %s41, %s57
      %p59 = scmp.eq.s32.totalorder %s19, 0
      %p60 = por %p58, %p59
      %s61 = ssub.s32 %s20, %s32
      %p62 = scmp.eq.s32.totalorder %s61, 0
      %s64 = sadd.s32 %s63, 1
      %s65 = scalar_select %p62, %s63, %s64
      %p68 = pneg %p62
      %p69 = scmp.eq.s32.totalorder %s13, 1
      %p70 = por %p68, %p69
      %p71 = scmp.ne.s32.totalorder %s63, %s66
      %p72 = scmp.eq.s32.totalorder %s13, 0
      %p73 = por %p71, %p72
      %p74 = scmp.ne.s32.totalorder %s63, %s66
      %p75 = scmp.eq.s32.totalorder %s18, 1
      %p76 = por %p74, %p75
      %p77 = scmp.ne.s32.totalorder %s66, %s67
      %p78 = scmp.eq.s32.totalorder %s18, 0
      %p79 = por %p77, %p78
      %p80 = scmp.ne.s32.totalorder %s66, %s67
      %p81 = scmp.eq.s32.totalorder %s19, 1
      %p82 = por %p80, %p81
      %p84 = scmp.ne.s32.totalorder %s67, %s83
      %p85 = scmp.eq.s32.totalorder %s19, 0
      %p86 = por %p84, %p85
      %p87 = scmp.le.s32.totalorder 1, %s13
      %p88 = scmp.lt.s32.totalorder %s13, 3
      %p89 = pnand %p87, %p88
      %p90 = pneg %p89
      // Predicated region
      $region9: #{tpu_custom_call.1} parent=5 // pred_check
        _
      $region10: #{tpu_custom_call.1} parent=5 // pred_check_branch
        %92 = sbr.rel (%p89) target = $region12
      $region11: #{tpu_custom_call.1} parent=5 // pred_region
        %s93 = ssub.s32 %s13, 1
      $region12: #{tpu_custom_call.1} parent=5 // pred_fallthru
        _
      %p94 = scmp.lt.s32.totalorder %s13, 2
      // Predicated region
      $region13: #{tpu_custom_call.1} parent=5 // pred_check
        %p95 = pneg %p94
      $region14: #{tpu_custom_call.1} parent=5 // pred_check_branch
        %97 = sbr.rel (%p95) target = $region16
      $region15: #{tpu_custom_call.1} parent=5 // pred_region
        // Predicated region
        $region17: #{tpu_custom_call.1} parent=15 // pred_check
          %p98 = pneg %p47
        $region18: #{tpu_custom_call.1} parent=15 // pred_check_branch
          %100 = sbr.rel (%p98) target = $region20
        $region19: #{tpu_custom_call.1} parent=15 // pred_region
          %s101 = sand.u32 %s37, 1
          %s102 = scalar_lea.sflag [#allocation3], %s101
          %s103 = sand.u32 %s37, 1
          %s104 = smul.addr %s103, 128
          %s105 = scalar_lea.vmem [#allocation2], %s104
          %s106 = smul.u32 16, %s21
          %s108 = ssub.s32 2048, 2048
          %109 = vsyncadd %s102, %s108
          %s110 = smul.addr %s20, 16
          %s111 = sadd.s32 %s106, %s110
          %s112 = smul.addr %s111, 128
          %s113 = scalar_lea.hbm %s0, %s112
          %s114 = sshll.u32 %s105, 4
          %s115 = int_to_ptr.vmem [resolvable:$true] %s114
          %120 = dma.hbm_to_vmem [thread:$0]  %s113, 2048, %s115, %s102, 128, 128, 8
        $region20: #{tpu_custom_call.1} parent=15 // pred_fallthru
          _
      $region16: #{tpu_custom_call.1} parent=5 // pred_fallthru
        _
      %p121 = scmp.le.s32.totalorder 1, %s13
      %p122 = scmp.lt.s32.totalorder %s13, 3
      %p123 = pnand %p121, %p122
      %p124 = pneg %p123
      // Predicated region
      $region21: #{tpu_custom_call.1} parent=5 // pred_check
        _
      $region22: #{tpu_custom_call.1} parent=5 // pred_check_branch
        %126 = sbr.rel (%p123) target = $region24
      $region23: #{tpu_custom_call.1} parent=5 // pred_region
        %s127 = ssub.s32 %s13, 1
        %s128 = sand.u32 %s40, 1
        %s129 = scalar_lea.sflag [#allocation3], %s128
        %s130 = sand.u32 %s40, 1
        %s131 = smul.addr %s130, 128
        %s132 = scalar_lea.vmem [#allocation2], %s131
        // Predicated region
        $region25: #{tpu_custom_call.1} parent=23 // pred_check
          %p133 = pneg %p53
        $region26: #{tpu_custom_call.1} parent=23 // pred_check_branch
          %135 = sbr.rel (%p133) target = $region28
        $region27: #{tpu_custom_call.1} parent=23 // pred_region
          %136 = dma.done %s129, 2048
        $region28: #{tpu_custom_call.1} parent=23 // pred_fallthru
          _
        %s137 = sand.u32 %s40, 1
        %s138 = scalar_lea.sflag [#allocation3], %s137
        %s139 = sand.u32 %s40, 1
        %s140 = smul.addr %s139, 128
        %s141 = scalar_lea.vmem [#allocation2], %s140
        %p142 = pneg %p53
        %p143 = pneg %p50
        %p144 = pneg %p79
        %p145 = pneg %p76
        %s146 = sand.u32 %s66, 1
        %s147 = scalar_lea.sflag [#allocation4], %s146
        %s148 = sand.u32 %s66, 1
        %s149 = smul.addr %s148, 2
        %s150 = scalar_lea.vmem [#allocation5], %s149
        %s151 = smul.u32 16, %s23
        %p152 = scmp.eq.s32.totalorder %s23, 0
        // Predicated region
        $region29: #{tpu_custom_call.1} parent=23 // pred_check
          %p153 = pneg %p152
        $region30: #{tpu_custom_call.1} parent=23 // pred_check_branch
          %155 = sbr.rel (%p153) target = $region32
        $region31: #{tpu_custom_call.1} parent=23 // pred_region
          %156 = vst [vmem:[%s150] sm:$0x3] 0.0
        $region32: #{tpu_custom_call.1} parent=23 // pred_fallthru
          _
        %v157 = vld [vmem:[%s132] sm:$0xff]
        %v158 = vld [vmem:[%s132 + $0x8] sm:$0xff]
        %v159 = vld [vmem:[%s132 + $0x10] sm:$0xff]
        %v160 = vld [vmem:[%s132 + $0x18] sm:$0xff]
        %v161 = vld [vmem:[%s132 + $0x20] sm:$0xff]
        %v162 = vld [vmem:[%s132 + $0x28] sm:$0xff]
        %v163 = vld [vmem:[%s132 + $0x30] sm:$0xff]
        %v164 = vld [vmem:[%s132 + $0x38] sm:$0xff]
        %v165 = vld [vmem:[%s132 + $0x40] sm:$0xff]
        %v166 = vld [vmem:[%s132 + $0x48] sm:$0xff]
        %v167 = vld [vmem:[%s132 + $0x50] sm:$0xff]
        %v168 = vld [vmem:[%s132 + $0x58] sm:$0xff]
        %v169 = vld [vmem:[%s132 + $0x60] sm:$0xff]
        %v170 = vld [vmem:[%s132 + $0x68] sm:$0xff]
        %v171 = vld [vmem:[%s132 + $0x70] sm:$0xff]
        %v172 = vld [vmem:[%s132 + $0x78] sm:$0xff]
        %v173 = vadd.f32 %v157, %v158
        %v174 = vadd.f32 %v173, %v159
        %v175 = vadd.f32 %v174, %v160
        %v176 = vadd.f32 %v175, %v161
        %v177 = vadd.f32 %v176, %v162
        %v178 = vadd.f32 %v177, %v163
        %v179 = vadd.f32 %v178, %v164
        %v180 = vadd.f32 %v179, %v165
        %v181 = vadd.f32 %v180, %v166
        %v182 = vadd.f32 %v181, %v167
        %v183 = vadd.f32 %v182, %v168
        %v184 = vadd.f32 %v183, %v169
        %v185 = vadd.f32 %v184, %v170
        %v186 = vadd.f32 %v185, %v171
        %v187 = vadd.f32 %v186, %v172
        %v188 = vrot.slane %v187, 4
        %v189 = vadd.f32 %v187, %v188
        %v190 = vrot.slane %v189, 2
        %v191 = vadd.f32 %v189, %v190
        %v192 = vrot.slane %v191, 1
        %v193 = vadd.f32 %v191, %v192
        %v194 = vmul.f32 %v157, %v157
        %v195 = vmul.f32 %v158, %v158
        %v196 = vmul.f32 %v159, %v159
        %v197 = vmul.f32 %v160, %v160
        %v198 = vmul.f32 %v161, %v161
        %v199 = vmul.f32 %v162, %v162
        %v200 = vmul.f32 %v163, %v163
        %v201 = vmul.f32 %v164, %v164
        %v202 = vmul.f32 %v165, %v165
        %v203 = vmul.f32 %v166, %v166
        %v204 = vmul.f32 %v167, %v167
        %v205 = vmul.f32 %v168, %v168
        %v206 = vmul.f32 %v169, %v169
        %v207 = vmul.f32 %v170, %v170
        %v208 = vmul.f32 %v171, %v171
        %v209 = vmul.f32 %v172, %v172
        %v210 = vadd.f32 %v194, %v195
        %v211 = vadd.f32 %v210, %v196
        %v212 = vadd.f32 %v211, %v197
        %v213 = vadd.f32 %v212, %v198
        %v214 = vadd.f32 %v213, %v199
        %v215 = vadd.f32 %v214, %v200
        %v216 = vadd.f32 %v215, %v201
        %v217 = vadd.f32 %v216, %v202
        %v218 = vadd.f32 %v217, %v203
        %v219 = vadd.f32 %v218, %v204
        %v220 = vadd.f32 %v219, %v205
        %v221 = vadd.f32 %v220, %v206
        %v222 = vadd.f32 %v221, %v207
        %v223 = vadd.f32 %v222, %v208
        %v224 = vadd.f32 %v223, %v209
        %v225 = vrot.slane %v224, 4
        %v226 = vadd.f32 %v224, %v225
        %v227 = vrot.slane %v226, 2
        %v228 = vadd.f32 %v226, %v227
        %v229 = vrot.slane %v228, 1
        %v230 = vadd.f32 %v228, %v229
        %v231 = vld [vmem:[%s150] sm:$0x3]
        %vm232 = vcmask 1040384
        %v233 = vsel %vm232, %v193, %v230
        %v234 = vadd.f32 %v231, %v233
        %235 = vst [vmem:[%s150] sm:$0x3] %v234
        %s236 = sand.u32 %s66, 1
        %s237 = scalar_lea.sflag [#allocation4], %s236
        %s238 = sand.u32 %s66, 1
        %s239 = smul.addr %s238, 2
        %s240 = scalar_lea.vmem [#allocation5], %s239
        // Predicated region
        $region33: #{tpu_custom_call.1} parent=23 // pred_check
          %p241 = pneg %p76
        $region34: #{tpu_custom_call.1} parent=23 // pred_check_branch
          %243 = sbr.rel (%p241) target = $region36
        $region35: #{tpu_custom_call.1} parent=23 // pred_region
          %s245 = ssub.s32 32, 32
          %246 = vsyncadd %s237, %s245
          %s247 = smul.addr %s22, 32
          %s248 = scalar_lea.hbm %s1, %s247
          %s250 = sshll.u32 %s240, 4
          %s251 = int_to_ptr.vmem [resolvable:$true] %s250
          %253 = dma.vmem_to_hbm [thread:$0]  %s251, 32, %s248, %s237
        $region36: #{tpu_custom_call.1} parent=23 // pred_fallthru
          _
      $region24: #{tpu_custom_call.1} parent=5 // pred_fallthru
        _
      %p254 = scmp.le.s32.totalorder 2, %s13
      // Predicated region
      $region37: #{tpu_custom_call.1} parent=5 // pred_check
        %p255 = pneg %p254
      $region38: #{tpu_custom_call.1} parent=5 // pred_check_branch
        %257 = sbr.rel (%p255) target = $region40
      $region39: #{tpu_custom_call.1} parent=5 // pred_region
        %s258 = ssub.s32 %s13, 2
        // Predicated region
        $region41: #{tpu_custom_call.1} parent=39 // pred_check
          %p259 = pneg %p82
        $region42: #{tpu_custom_call.1} parent=39 // pred_check_branch
          %261 = sbr.rel (%p259) target = $region44
        $region43: #{tpu_custom_call.1} parent=39 // pred_region
          %s262 = sand.u32 %s67, 1
          %s263 = scalar_lea.sflag [#allocation4], %s262
          %s264 = sand.u32 %s67, 1
          %s265 = smul.addr %s264, 2
          %s266 = scalar_lea.vmem [#allocation5], %s265
          %267 = dma.done %s263, 32
        $region44: #{tpu_custom_call.1} parent=39 // pred_fallthru
          _
      $region40: #{tpu_custom_call.1} parent=5 // pred_fallthru
        _
    $region6: #{tpu_custom_call.1} parent=1 // loop_footer
      %s17 = sadd.s32 1, %s13
    $region7: #{tpu_custom_call.1} parent=1 // loop_footer_branch
      %12 = sbr.rel target = $region3
    $region8: #{tpu_custom_call.1} parent=1 // loop_exit
      _
    %268 = vsyncpa [#allocation3], 1
    %s269 = scalar_lea.sflag [#allocation3], 1
    %270 = vsyncpa %s269, 1
    %271 = vsyncpa [#allocation4], 1
    %s272 = scalar_lea.sflag [#allocation4], 1
    %273 = vsyncpa %s272, 1

</llo_original>
